<compile_context>
chip_gen: v7x
topology: tpu7x:2x2x1
jax: 0.10.0
libtpu: 0.0.40
codegen_flags: <defaults>
</compile_context>

<pallas_src>
import functools
from typing import NamedTuple

import jax
import jax.numpy as jnp
from jax.experimental import pallas as pl
from jax.experimental.pallas import tpu as pltpu

_LANE = 128
_SUB = 8  # sublane multiple for the batch tile


def _round_up(n, m):
    return ((n + m - 1) // m) * m


def _cdiv(a, b):
    return -(-a // b)


class EncoderParams(NamedTuple):
    """Pre-packed, lane-aligned parameters (built once by `prepare_params`)."""
    w1: jax.Array   # (input_p,  2*hidden_p)  [Wa | Wg], compute dtype
    b1: jax.Array   # (1,        2*hidden_p)  f32
    w2: jax.Array   # (hidden_p, 2*hidden_p)
    b2: jax.Array   # (1,        2*hidden_p)
    wf: jax.Array   # (hidden_p, 2*latent_p)  [Wmu | Wlogvar]
    bf: jax.Array   # (1,        2*latent_p)
    input_dim: int
    hidden_dim: int
    latent_dim: int


def prepare_params(params, *, input_dim, hidden_dim, latent_dim,
                   compute_dtype=jnp.bfloat16):
    """Split/pad/cast the raw (in,out) weights ONCE.

    Each GLU (or mu/logvar) pair is split at the torch chunk boundary, each half is
    zero-padded to a multiple of 128 lanes, then re-concatenated, so the kernel's
    split at the padded midpoint is tile-aligned and numerically identical.
    """
    w1, b1, w2, b2, wf, bf = params
    input_p = _round_up(input_dim, _LANE)
    hidden_p = _round_up(hidden_dim, _LANE)
    latent_p = _round_up(latent_dim, _LANE)

    def pack_w(w, rows_p, half, half_p, dtype):
        a = jnp.pad(w[:, :half], ((0, rows_p - w.shape[0]), (0, half_p - half)))
        g = jnp.pad(w[:, half:], ((0, rows_p - w.shape[0]), (0, half_p - half)))
        return jnp.concatenate([a, g], axis=1).astype(dtype)

    def pack_b(b, half, half_p):
        a = jnp.pad(b[:, :half], ((0, 0), (0, half_p - half)))
        g = jnp.pad(b[:, half:], ((0, 0), (0, half_p - half)))
        return jnp.concatenate([a, g], axis=1).astype(jnp.float32)

    return EncoderParams(
        w1=pack_w(w1, input_p, hidden_dim, hidden_p, compute_dtype),
        b1=pack_b(b1, hidden_dim, hidden_p),
        w2=pack_w(w2, hidden_p, hidden_dim, hidden_p, compute_dtype),
        b2=pack_b(b2, hidden_dim, hidden_p),
        wf=pack_w(wf, hidden_p, latent_dim, latent_p, compute_dtype),
        bf=pack_b(bf, latent_dim, latent_p),
        input_dim=input_dim, hidden_dim=hidden_dim, latent_dim=latent_dim,
    )


def mlp_encoder_kernel(x_ref, w1_ref, b1_ref, w2_ref, b2_ref, wf_ref, bf_ref,
                       mu_ref, logvar_ref, h_ref):
    cd = w1_ref.dtype                    # matmul operand dtype (bf16 or f32)
    hidden_p = w1_ref.shape[1] // 2
    latent_p = wf_ref.shape[1] // 2

    x = x_ref[...].astype(cd)            # cast in-kernel (saves a wrapper HBM pass)

    # Layer 1: one (tm, 2*hidden_p) matmul; GLU split at the 128-aligned midpoint.
    z1 = jnp.dot(x, w1_ref[...], preferred_element_type=jnp.float32) + b1_ref[...]
    h1 = z1[:, :hidden_p] * jax.nn.sigmoid(z1[:, hidden_p:])
    # TODO(synk): dropout_p > 0 would need pltpu.prng_* masking here; p == 0.0 is identity.

    # Layer 2.
    z2 = jnp.dot(h1.astype(cd), w2_ref[...],
                 preferred_element_type=jnp.float32) + b2_ref[...]
    h2 = z2[:, :hidden_p] * jax.nn.sigmoid(z2[:, hidden_p:])

    # Final projection: one (tm, 2*latent_p) matmul; chunk at the aligned midpoint.
    p = jnp.dot(h2.astype(cd), wf_ref[...],
                preferred_element_type=jnp.float32) + bf_ref[...]

    mu_ref[...] = p[:, :latent_p].astype(mu_ref.dtype)
    # F.hardtanh(logvar, -6.0, 2.0) == clip
    logvar_ref[...] = jnp.clip(p[:, latent_p:], -6.0, 2.0).astype(logvar_ref.dtype)
    # Output writeback is scheduled by the pipeline at the grid-step boundary, so
    # store order here is irrelevant; if h writeback ever shows up as exposed, use
    # pipeline_mode=pl.Buffered(3) on the h out_spec instead.
    h_ref[...] = h2.astype(h_ref.dtype)


def mlp_encoder_forward(x, ep: EncoderParams, *, block_m=512,
                        vmem_limit_bytes=48 << 20, out_dtype=None, trim=True):
    """Non-deterministic MLP_Encoder forward (nb_layers=2). Returns (mu, logvar, h).

    `ep` must come from `prepare_params` (weights already packed/padded/cast).
    out_dtype: dtype of the kernel outputs (default x.dtype; pass bf16 to halve
    the h writeback). trim=False returns the padded arrays (skips the slice copies).
    """
    batch, input_dim = x.shape
    assert input_dim == ep.input_dim
    input_p = ep.w1.shape[0]
    hidden_p = ep.w1.shape[1] // 2
    latent_p = ep.wf.shape[1] // 2
    out_dtype = x.dtype if out_dtype is None else out_dtype

    cd_bytes = jnp.dtype(ep.w1.dtype).itemsize
    x_bytes = jnp.dtype(x.dtype).itemsize
    o_bytes = jnp.dtype(out_dtype).itemsize

    # --- batch-tile selection ------------------------------------------------
    # Single-buffered resident weights + double-buffered x/out tiles + ~3 live
    # f32 intermediates of width 2*hidden_p must fit the VMEM budget (v7x: 64 MiB
    # physical, so default limit is 48 MiB).
    weight_bytes = ((ep.w1.size + ep.w2.size + ep.wf.size) * cd_bytes
                    + (ep.b1.size + ep.b2.size + ep.bf.size) * 4)

    def vmem_estimate(tm):
        io = 2 * tm * input_p * x_bytes + 2 * tm * (2 * latent_p + hidden_p) * o_bytes
        live = 3 * tm * 2 * hidden_p * 4
        return weight_bytes + io + live

    # >=2 grid steps when the batch allows (v7x megacore); tm a sublane multiple,
    # sized to minimise batch padding, capped by block_m.
    n_steps = max(2 if batch > _SUB else 1, _cdiv(batch, block_m))
    tm = min(_round_up(_cdiv(batch, n_steps), _SUB), _round_up(block_m, _SUB))
    while tm > _SUB and vmem_estimate(tm) > vmem_limit_bytes:
        tm = _round_up(tm // 2, _SUB)

    batch_p = _round_up(batch, tm)
    grid = (batch_p // tm,)

    x_p = jnp.pad(x, ((0, batch_p - batch), (0, input_p - input_dim)))

    def btile(width):
        return pl.BlockSpec((tm, width), lambda i: (i, 0))

    def resident(arr):
        # Constant block index -> stays in VMEM across all grid steps; single
        # buffering since it is never re-fetched.
        return pl.BlockSpec(arr.shape, lambda i: (0, 0),
                            pipeline_mode=pl.Buffered(1))

    mu_p, logvar_p, h_p = pl.pallas_call(
        mlp_encoder_kernel,
        out_shape=(
            jax.ShapeDtypeStruct((batch_p, latent_p), out_dtype),   # mu (padded)
            jax.ShapeDtypeStruct((batch_p, latent_p), out_dtype),   # logvar (padded)
            jax.ShapeDtypeStruct((batch_p, hidden_p), out_dtype),   # h (padded)
        ),
        grid=grid,
        in_specs=[
            btile(input_p),
            resident(ep.w1), resident(ep.b1),
            resident(ep.w2), resident(ep.b2),
            resident(ep.wf), resident(ep.bf),
        ],
        out_specs=(btile(latent_p), btile(latent_p), btile(hidden_p)),
        compiler_params=pltpu.CompilerParams(
            dimension_semantics=("parallel",),
            vmem_limit_bytes=vmem_limit_bytes,
        ),
    )(x_p, ep.w1, ep.b1, ep.w2, ep.b2, ep.wf, ep.bf)

    if not trim:
        return mu_p, logvar_p, h_p
    return (mu_p[:batch, :ep.latent_dim],
            logvar_p[:batch, :ep.latent_dim],
            h_p[:batch, :ep.hidden_dim])


def init_params(key, input_dim, hidden_dim, latent_dim):
    """Deterministic synthetic parameters, stored as (in, out) for  x @ W + b."""
    k1, k2, k3, k4, k5, k6 = jax.random.split(key, 6)

    def lin(kw, kb, fan_in, fan_out):
        bound = 1.0 / jnp.sqrt(fan_in)
        w = jax.random.uniform(kw, (fan_in, fan_out), jnp.float32, -bound, bound)
        b = jax.random.uniform(kb, (1, fan_out), jnp.float32, -bound, bound)
        return w, b

    w1, b1 = lin(k1, k2, input_dim, hidden_dim * 2)   # layer 0
    w2, b2 = lin(k3, k4, hidden_dim, hidden_dim * 2)  # layer 1
    wf, bf = lin(k5, k6, hidden_dim, latent_dim * 2)  # final (non-deterministic)
    return (w1, b1, w2, b2, wf, bf)


def reference_forward(x, params, *, hidden_dim, latent_dim):
    """Pure-JAX reference for a sanity check."""
    w1, b1, w2, b2, wf, bf = params
    z = x @ w1 + b1
    h = z[:, :hidden_dim] * jax.nn.sigmoid(z[:, hidden_dim:])
    z = h @ w2 + b2
    h = z[:, :hidden_dim] * jax.nn.sigmoid(z[:, hidden_dim:])
    p = h @ wf + bf
    mu, logvar = p[:, :latent_dim], p[:, latent_dim:]
    return mu, jnp.clip(logvar, -6.0, 2.0), h


if __name__ == "__main__":
    batch, input_dim, hidden_dim, latent_dim = 16, 48, 32, 16

    key = jax.random.PRNGKey(0)
    kx, kp = jax.random.split(key)
    x = jax.random.normal(kx, (batch, input_dim), jnp.float32)
    params = init_params(kp, input_dim, hidden_dim, latent_dim)
    mu_r, logvar_r, h_r = reference_forward(
        x, params, hidden_dim=hidden_dim, latent_dim=latent_dim)

    # Default path: bf16 MXU operands, f32 accumulation / bias / activations.
    ep_bf16 = prepare_params(params, input_dim=input_dim, hidden_dim=hidden_dim,
                             latent_dim=latent_dim)               # done once
    mu, logvar, h = mlp_encoder_forward(x, ep_bf16)
    jax.block_until_ready((mu, logvar, h))
    assert mu.shape == (batch, latent_dim)
    assert logvar.shape == (batch, latent_dim)
    assert h.shape == (batch, hidden_dim)
    assert jnp.allclose(mu, mu_r, atol=1e-1)
    assert jnp.allclose(logvar, logvar_r, atol=1e-1)
    assert jnp.allclose(h, h_r, atol=1e-1)

    # Padded / bf16-output path (no post-kernel slice copies).
    mu_p, logvar_p, h_p = mlp_encoder_forward(
        x, ep_bf16, out_dtype=jnp.bfloat16, trim=False)
    jax.block_until_ready((mu_p, logvar_p, h_p))
    assert h_p.shape == (16, 128) and h_p.dtype == jnp.bfloat16

    # f32 operands -- tighter check of the packing / GLU / chunk plumbing.
    ep_f32 = prepare_params(params, input_dim=input_dim, hidden_dim=hidden_dim,
                            latent_dim=latent_dim, compute_dtype=jnp.float32)
    mu32, logvar32, h32 = mlp_encoder_forward(x, ep_f32)
    jax.block_until_ready((mu32, logvar32, h32))
    assert jnp.allclose(mu32, mu_r, atol=1e-3)
    assert jnp.allclose(logvar32, logvar_r, atol=1e-3)
    assert jnp.allclose(h32, h_r, atol=1e-3)

    print("KERNEL_OK")
</pallas_src>

<mosaic_0001>
module attributes {stable_mosaic.version = 11 : i64} {
  func.func @mlp_encoder_kernel(%arg0: i32, %arg1: memref<8x128xf32, #tpu.memory_space<vmem>>, %arg2: memref<128x256xbf16, #tpu.memory_space<vmem>>, %arg3: memref<1x256xf32, #tpu.memory_space<vmem>>, %arg4: memref<128x256xbf16, #tpu.memory_space<vmem>>, %arg5: memref<1x256xf32, #tpu.memory_space<vmem>>, %arg6: memref<128x256xbf16, #tpu.memory_space<vmem>>, %arg7: memref<1x256xf32, #tpu.memory_space<vmem>>, %arg8: memref<8x128xf32, #tpu.memory_space<vmem>>, %arg9: memref<8x128xf32, #tpu.memory_space<vmem>>, %arg10: memref<8x128xf32, #tpu.memory_space<vmem>>) attributes {dimension_semantics = [#tpu.dimension_semantics<parallel>], iteration_bounds = array<i64: 2>, scalar_prefetch = 0 : i64, scratch_operands = 0 : i64, tpu.core_type = #tpu.core_type<tc>, window_params = [{transform_indices = @transform_0, window_bounds = array<i64: 8, 128>}, {pipeline_mode = #tpu.pipeline_mode<synchronous>, transform_indices = @transform_1, window_bounds = array<i64: 128, 256>}, {pipeline_mode = #tpu.pipeline_mode<synchronous>, transform_indices = @transform_2, window_bounds = array<i64: 1, 256>}, {pipeline_mode = #tpu.pipeline_mode<synchronous>, transform_indices = @transform_3, window_bounds = array<i64: 128, 256>}, {pipeline_mode = #tpu.pipeline_mode<synchronous>, transform_indices = @transform_4, window_bounds = array<i64: 1, 256>}, {pipeline_mode = #tpu.pipeline_mode<synchronous>, transform_indices = @transform_5, window_bounds = array<i64: 128, 256>}, {pipeline_mode = #tpu.pipeline_mode<synchronous>, transform_indices = @transform_6, window_bounds = array<i64: 1, 256>}, {transform_indices = @transform_7, window_bounds = array<i64: 8, 128>}, {transform_indices = @transform_8, window_bounds = array<i64: 8, 128>}, {transform_indices = @transform_9, window_bounds = array<i64: 8, 128>}]} {
    %c0 = arith.constant 0 : index
    %c0_0 = arith.constant 0 : index
    %0 = vector.load %arg1[%c0, %c0_0] : memref<8x128xf32, #tpu.memory_space<vmem>>, vector<8x128xf32>
    %1 = arith.truncf %0 : vector<8x128xf32> to vector<8x128xbf16>
    %c0_1 = arith.constant 0 : index
    %c0_2 = arith.constant 0 : index
    %2 = vector.load %arg2[%c0_1, %c0_2] : memref<128x256xbf16, #tpu.memory_space<vmem>>, vector<128x256xbf16>
    %cst = arith.constant dense<0.000000e+00> : vector<8x256xf32>
    %3 = tpu.matmul %1, %2, %cst {dimension_numbers = #tpu.dot_dimension_numbers<[1], [0], [0], [1], [0, 0, 1, 1], [], []>} : vector<8x128xbf16>, vector<128x256xbf16>, vector<8x256xf32> -> vector<8x256xf32>
    %c0_3 = arith.constant 0 : index
    %c0_4 = arith.constant 0 : index
    %4 = vector.load %arg3[%c0_3, %c0_4] : memref<1x256xf32, #tpu.memory_space<vmem>>, vector<1x256xf32>
    %5 = vector.broadcast %4 : vector<1x256xf32> to vector<8x256xf32>
    %6 = arith.addf %3, %5 : vector<8x256xf32>
    %7 = vector.extract_strided_slice %6 {offsets = [0, 0], sizes = [8, 128], strides = [1, 1]} : vector<8x256xf32> to vector<8x128xf32>
    %8 = vector.extract_strided_slice %6 {offsets = [0, 128], sizes = [8, 128], strides = [1, 1]} : vector<8x256xf32> to vector<8x128xf32>
    %9 = arith.negf %8 : vector<8x128xf32>
    %10 = math.exp %9 : vector<8x128xf32>
    %cst_5 = arith.constant 1.000000e+00 : f32
    %11 = vector.broadcast %cst_5 : f32 to vector<8x128xf32>
    %12 = arith.addf %11, %10 : vector<8x128xf32>
    %13 = arith.divf %11, %12 : vector<8x128xf32>
    %14 = arith.mulf %7, %13 : vector<8x128xf32>
    %15 = arith.truncf %14 : vector<8x128xf32> to vector<8x128xbf16>
    %c0_6 = arith.constant 0 : index
    %c0_7 = arith.constant 0 : index
    %16 = vector.load %arg4[%c0_6, %c0_7] : memref<128x256xbf16, #tpu.memory_space<vmem>>, vector<128x256xbf16>
    %cst_8 = arith.constant dense<0.000000e+00> : vector<8x256xf32>
    %17 = tpu.matmul %15, %16, %cst_8 {dimension_numbers = #tpu.dot_dimension_numbers<[1], [0], [0], [1], [0, 0, 1, 1], [], []>} : vector<8x128xbf16>, vector<128x256xbf16>, vector<8x256xf32> -> vector<8x256xf32>
    %c0_9 = arith.constant 0 : index
    %c0_10 = arith.constant 0 : index
    %18 = vector.load %arg5[%c0_9, %c0_10] : memref<1x256xf32, #tpu.memory_space<vmem>>, vector<1x256xf32>
    %19 = vector.broadcast %18 : vector<1x256xf32> to vector<8x256xf32>
    %20 = arith.addf %17, %19 : vector<8x256xf32>
    %21 = vector.extract_strided_slice %20 {offsets = [0, 0], sizes = [8, 128], strides = [1, 1]} : vector<8x256xf32> to vector<8x128xf32>
    %22 = vector.extract_strided_slice %20 {offsets = [0, 128], sizes = [8, 128], strides = [1, 1]} : vector<8x256xf32> to vector<8x128xf32>
    %23 = arith.negf %22 : vector<8x128xf32>
    %24 = math.exp %23 : vector<8x128xf32>
    %cst_11 = arith.constant 1.000000e+00 : f32
    %25 = vector.broadcast %cst_11 : f32 to vector<8x128xf32>
    %26 = arith.addf %25, %24 : vector<8x128xf32>
    %27 = arith.divf %25, %26 : vector<8x128xf32>
    %28 = arith.mulf %21, %27 : vector<8x128xf32>
    %29 = arith.truncf %28 : vector<8x128xf32> to vector<8x128xbf16>
    %c0_12 = arith.constant 0 : index
    %c0_13 = arith.constant 0 : index
    %30 = vector.load %arg6[%c0_12, %c0_13] : memref<128x256xbf16, #tpu.memory_space<vmem>>, vector<128x256xbf16>
    %cst_14 = arith.constant dense<0.000000e+00> : vector<8x256xf32>
    %31 = tpu.matmul %29, %30, %cst_14 {dimension_numbers = #tpu.dot_dimension_numbers<[1], [0], [0], [1], [0, 0, 1, 1], [], []>} : vector<8x128xbf16>, vector<128x256xbf16>, vector<8x256xf32> -> vector<8x256xf32>
    %c0_15 = arith.constant 0 : index
    %c0_16 = arith.constant 0 : index
    %32 = vector.load %arg7[%c0_15, %c0_16] : memref<1x256xf32, #tpu.memory_space<vmem>>, vector<1x256xf32>
    %33 = vector.broadcast %32 : vector<1x256xf32> to vector<8x256xf32>
    %34 = arith.addf %31, %33 : vector<8x256xf32>
    %35 = vector.extract_strided_slice %34 {offsets = [0, 0], sizes = [8, 128], strides = [1, 1]} : vector<8x256xf32> to vector<8x128xf32>
    %c0_17 = arith.constant 0 : index
    %c0_18 = arith.constant 0 : index
    %36 = vector.load %arg8[%c0_17, %c0_18] : memref<8x128xf32, #tpu.memory_space<vmem>>, vector<8x128xf32>
    tpu.vector_store %arg8[%c0_17, %c0_18], %35 {strides = array<i32>} : memref<8x128xf32, #tpu.memory_space<vmem>>, vector<8x128xf32>,
    %37 = vector.extract_strided_slice %34 {offsets = [0, 128], sizes = [8, 128], strides = [1, 1]} : vector<8x256xf32> to vector<8x128xf32>
    %cst_19 = arith.constant -6.000000e+00 : f32
    %cst_20 = arith.constant 2.000000e+00 : f32
    %38 = vector.broadcast %cst_19 : f32 to vector<8x128xf32>
    %39 = arith.maximumf %38, %37 : vector<8x128xf32>
    %40 = vector.broadcast %cst_20 : f32 to vector<8x128xf32>
    %41 = arith.minimumf %40, %39 : vector<8x128xf32>
    %c0_21 = arith.constant 0 : index
    %c0_22 = arith.constant 0 : index
    %42 = vector.load %arg9[%c0_21, %c0_22] : memref<8x128xf32, #tpu.memory_space<vmem>>, vector<8x128xf32>
    tpu.vector_store %arg9[%c0_21, %c0_22], %41 {strides = array<i32>} : memref<8x128xf32, #tpu.memory_space<vmem>>, vector<8x128xf32>,
    %c0_23 = arith.constant 0 : index
    %c0_24 = arith.constant 0 : index
    %43 = vector.load %arg10[%c0_23, %c0_24] : memref<8x128xf32, #tpu.memory_space<vmem>>, vector<8x128xf32>
    tpu.vector_store %arg10[%c0_23, %c0_24], %28 {strides = array<i32>} : memref<8x128xf32, #tpu.memory_space<vmem>>, vector<8x128xf32>,
    return
  }
  func.func @transform_0(%arg0: i32) -> (i32, i32) {
    %c0_i32 = arith.constant 0 : i32
    %c0_i32_0 = arith.constant 0 : i32
    return %arg0, %c0_i32 : i32, i32
  }
  func.func @transform_1(%arg0: i32) -> (i32, i32) {
    %c0_i32 = arith.constant 0 : i32
    %c0_i32_0 = arith.constant 0 : i32
    %c0_i32_1 = arith.constant 0 : i32
    return %c0_i32, %c0_i32_0 : i32, i32
  }
  func.func @transform_2(%arg0: i32) -> (i32, i32) {
    %c0_i32 = arith.constant 0 : i32
    %c0_i32_0 = arith.constant 0 : i32
    %c0_i32_1 = arith.constant 0 : i32
    return %c0_i32, %c0_i32_0 : i32, i32
  }
  func.func @transform_3(%arg0: i32) -> (i32, i32) {
    %c0_i32 = arith.constant 0 : i32
    %c0_i32_0 = arith.constant 0 : i32
    %c0_i32_1 = arith.constant 0 : i32
    return %c0_i32, %c0_i32_0 : i32, i32
  }
  func.func @transform_4(%arg0: i32) -> (i32, i32) {
    %c0_i32 = arith.constant 0 : i32
    %c0_i32_0 = arith.constant 0 : i32
    %c0_i32_1 = arith.constant 0 : i32
    return %c0_i32, %c0_i32_0 : i32, i32
  }
  func.func @transform_5(%arg0: i32) -> (i32, i32) {
    %c0_i32 = arith.constant 0 : i32
    %c0_i32_0 = arith.constant 0 : i32
    %c0_i32_1 = arith.constant 0 : i32
    return %c0_i32, %c0_i32_0 : i32, i32
  }
  func.func @transform_6(%arg0: i32) -> (i32, i32) {
    %c0_i32 = arith.constant 0 : i32
    %c0_i32_0 = arith.constant 0 : i32
    %c0_i32_1 = arith.constant 0 : i32
    return %c0_i32, %c0_i32_0 : i32, i32
  }
  func.func @transform_7(%arg0: i32) -> (i32, i32) {
    %c0_i32 = arith.constant 0 : i32
    %c0_i32_0 = arith.constant 0 : i32
    return %arg0, %c0_i32 : i32, i32
  }
  func.func @transform_8(%arg0: i32) -> (i32, i32) {
    %c0_i32 = arith.constant 0 : i32
    %c0_i32_0 = arith.constant 0 : i32
    return %arg0, %c0_i32 : i32, i32
  }
  func.func @transform_9(%arg0: i32) -> (i32, i32) {
    %c0_i32 = arith.constant 0 : i32
    %c0_i32_0 = arith.constant 0 : i32
    return %arg0, %c0_i32 : i32, i32
  }
}

</mosaic_0001>

<llo_original>
// kernel: tpu_custom_call.1
$region0: #{tpu_custom_call.1}
  #allocation0 [shape = 'u32[]', space=smem, size = 0x4, offset = 0x4, fixed_abs, tag = 'smem constant byte address 0x4 - core index']
  #allocation1 [shape = 'u32[144,128]{1,0:T(1,128)}', space=vmem, size = 0x12000, scoped, tag = 'internal scratch']
  %s0 = inlined_call_operand.hbm [shape: f32[16,128], index: 0, kind: input, shape index: {}]
  %s1 = inlined_call_operand.hbm [shape: bf16[128,256], index: 1, kind: input, shape index: {}]
  %s2 = inlined_call_operand.vmem [shape: f32[1,256], index: 2, kind: input, shape index: {}]
  %s3 = inlined_call_operand.hbm [shape: bf16[128,256], index: 3, kind: input, shape index: {}]
  %s4 = inlined_call_operand.vmem [shape: f32[1,256], index: 4, kind: input, shape index: {}]
  %s5 = inlined_call_operand.hbm [shape: bf16[128,256], index: 5, kind: input, shape index: {}]
  %s6 = inlined_call_operand.vmem [shape: f32[1,256], index: 6, kind: input, shape index: {}]
  %s7 = inlined_call_operand.hbm [shape: f32[16,128], index: 7, kind: output, shape index: {0}]
  %s8 = inlined_call_operand.hbm [shape: f32[16,128], index: 8, kind: output, shape index: {1}]
  %s9 = inlined_call_operand.hbm [shape: f32[16,128], index: 9, kind: output, shape index: {2}]
  %10 = xla_tuple %s7, %s8, %s9
  %s11 = sld [smem:[#allocation0]]
  $region93: #{tpu_custom_call.1} parent=0
    _
  %s13 = ssub.s32 1, %s11
  %s14 = scalar_select 0, %s13, %s11
  $region1: #{tpu_custom_call.1} parent=0
    #allocation2 [shape = 'u8[8192]{0}', space=vmem, size = 0x2000, scoped, tag = 'input window, operand 0']
    #allocation3 [shape = 's32[2]{0}', space=sflag, size = 0x8, scoped, tag = 'scoped memory for tpu_custom_call.1']
    #allocation4 [shape = 's32[2]{0}', space=sflag, size = 0x8, scoped, tag = 'scoped memory for tpu_custom_call.1']
    #allocation5 [shape = 'u8[65536]{0}', space=vmem, size = 0x10000, scoped, tag = 'input window, operand 1, single buffered']
    #allocation6 [shape = 's32[1]{0}', space=sflag, size = 0x4, scoped, tag = 'scoped memory for tpu_custom_call.1']
    #allocation7 [shape = 'u8[65536]{0}', space=vmem, size = 0x10000, scoped, tag = 'input window, operand 3, single buffered']
    #allocation8 [shape = 'u8[65536]{0}', space=vmem, size = 0x10000, scoped, tag = 'input window, operand 5, single buffered']
    #allocation9 [shape = 's32[1]{0}', space=sflag, size = 0x4, scoped, tag = 'scoped memory for tpu_custom_call.1']
    #allocation10 [shape = 'u8[8192]{0}', space=vmem, size = 0x2000, scoped, tag = 'output window, operand 0']
    #allocation11 [shape = 'u8[8192]{0}', space=vmem, size = 0x2000, scoped, tag = 'output window, operand 1']
    #allocation12 [shape = 's32[2]{0}', space=sflag, size = 0x8, scoped, tag = 'scoped memory for tpu_custom_call.1']
    #allocation13 [shape = 'u8[8192]{0}', space=vmem, size = 0x2000, scoped, tag = 'output window, operand 2']
    %15 = vsyncpa [#allocation3], 0
    %s16 = scalar_lea.sflag [#allocation3], 1
    %17 = vsyncpa %s16, 0
    %18 = vsyncpa [#allocation6], 0
    %19 = vsyncpa [#allocation9], 0
    %20 = vsyncpa [#allocation4], 0
    %s21 = scalar_lea.sflag [#allocation4], 1
    %22 = vsyncpa %s21, 0
    %23 = vsyncpa [#allocation12], 0
    %s24 = scalar_lea.sflag [#allocation12], 1
    %25 = vsyncpa %s24, 0
    loop: start=0, step=1, limit=4
    $region2: #{tpu_custom_call.1} parent=1 // loop_pre_header
      _
    $region3: #{tpu_custom_call.1} parent=1 // loop_header
      %s27 = sphi 0, %s31
      %p28 = scmp.ge.s32.totalorder %s27, 4
      %s37 = sphi 0, %s39
      %s40 = sphi 0, %s37
      %s41 = sphi 0, %s40
      %s57 = sphi 0, %s41
      %s61 = sphi 0, %s61
      %s63 = sphi 0, %s61
      %s64 = sphi 0, %s63
      %s78 = sphi 0, %s64
      %s82 = sphi 0, %s82
      %s84 = sphi 0, %s82
      %s85 = sphi 0, %s84
      %s99 = sphi 0, %s85
      %s103 = sphi 0, %s103
      %s105 = sphi 0, %s103
      %s106 = sphi 0, %s105
      %s120 = sphi 0, %s106
      %s124 = sphi 0, %s124
      %s126 = sphi 0, %s124
      %s127 = sphi 0, %s126
      %s141 = sphi 0, %s127
      %s145 = sphi 0, %s145
      %s147 = sphi 0, %s145
      %s148 = sphi 0, %s147
      %s162 = sphi 0, %s148
      %s166 = sphi 0, %s166
      %s168 = sphi 0, %s166
      %s169 = sphi 0, %s168
      %s183 = sphi 0, %s169
      %s189 = sphi 0, %s191
      %s192 = sphi 0, %s189
      %s193 = sphi 0, %s192
      %s209 = sphi 0, %s193
      %s215 = sphi 0, %s217
      %s218 = sphi 0, %s215
      %s219 = sphi 0, %s218
      %s235 = sphi 0, %s219
      %s241 = sphi 0, %s243
      %s244 = sphi 0, %s241
      %s245 = sphi 0, %s244
      %s261 = sphi 0, %s245
    $region4: #{tpu_custom_call.1} parent=1 // loop_header_branch
      %30 = sbr.rel (%p28) target = $region8
    $region5: #{tpu_custom_call.1} parent=1 // loop_body
      %s32 = ssub.s32 %s27, 1
      %s33 = ssub.s32 %s27, 2
      %s34 = sadd.s32 %s27, 1
      %s35 = ssub.s32 %s27, %s34
      %p36 = scmp.eq.s32.totalorder %s35, 0
      %s38 = sadd.s32 %s37, 1
      %s39 = scalar_select %p36, %s37, %s38
      %p42 = pneg %p36
      %p43 = scmp.eq.s32.totalorder %s27, 1
      %p44 = por %p42, %p43
      %p45 = scmp.ne.s32.totalorder %s37, %s40
      %p46 = scmp.eq.s32.totalorder %s27, 0
      %p47 = por %p45, %p46
      %p48 = scmp.ne.s32.totalorder %s37, %s40
      %p49 = scmp.eq.s32.totalorder %s32, 1
      %p50 = por %p48, %p49
      %p51 = scmp.ne.s32.totalorder %s40, %s41
      %p52 = scmp.eq.s32.totalorder %s32, 0
      %p53 = por %p51, %p52
      %p54 = scmp.ne.s32.totalorder %s40, %s41
      %p55 = scmp.eq.s32.totalorder %s33, 1
      %p56 = por %p54, %p55
      %p58 = scmp.ne.s32.totalorder %s41, %s57
      %p59 = scmp.eq.s32.totalorder %s33, 0
      %p60 = por %p58, %p59
      %s62 = sadd.s32 %s61, 1
      %p65 = scmp.eq.s32.totalorder %s27, 1
      %p66 = scmp.ne.s32.totalorder %s61, %s63
      %p67 = scmp.eq.s32.totalorder %s27, 0
      %p68 = por %p66, %p67
      %p69 = scmp.ne.s32.totalorder %s61, %s63
      %p70 = scmp.eq.s32.totalorder %s32, 1
      %p71 = por %p69, %p70
      %p72 = scmp.ne.s32.totalorder %s63, %s64
      %p73 = scmp.eq.s32.totalorder %s32, 0
      %p74 = por %p72, %p73
      %p75 = scmp.ne.s32.totalorder %s63, %s64
      %p76 = scmp.eq.s32.totalorder %s33, 1
      %p77 = por %p75, %p76
      %p79 = scmp.ne.s32.totalorder %s64, %s78
      %p80 = scmp.eq.s32.totalorder %s33, 0
      %p81 = por %p79, %p80
      %s83 = sadd.s32 %s82, 1
      %p86 = scmp.eq.s32.totalorder %s27, 1
      %p87 = scmp.ne.s32.totalorder %s82, %s84
      %p88 = scmp.eq.s32.totalorder %s27, 0
      %p89 = por %p87, %p88
      %p90 = scmp.ne.s32.totalorder %s82, %s84
      %p91 = scmp.eq.s32.totalorder %s32, 1
      %p92 = por %p90, %p91
      %p93 = scmp.ne.s32.totalorder %s84, %s85
      %p94 = scmp.eq.s32.totalorder %s32, 0
      %p95 = por %p93, %p94
      %p96 = scmp.ne.s32.totalorder %s84, %s85
      %p97 = scmp.eq.s32.totalorder %s33, 1
      %p98 = por %p96, %p97
      %p100 = scmp.ne.s32.totalorder %s85, %s99
      %p101 = scmp.eq.s32.totalorder %s33, 0
      %p102 = por %p100, %p101
      %s104 = sadd.s32 %s103, 1
      %p107 = scmp.eq.s32.totalorder %s27, 1
      %p108 = scmp.ne.s32.totalorder %s103, %s105
      %p109 = scmp.eq.s32.totalorder %s27, 0
      %p110 = por %p108, %p109
      %p111 = scmp.ne.s32.totalorder %s103, %s105
      %p112 = scmp.eq.s32.totalorder %s32, 1
      %p113 = por %p111, %p112
      %p114 = scmp.ne.s32.totalorder %s105, %s106
      %p115 = scmp.eq.s32.totalorder %s32, 0
      %p116 = por %p114, %p115
      %p117 = scmp.ne.s32.totalorder %s105, %s106
      %p118 = scmp.eq.s32.totalorder %s33, 1
      %p119 = por %p117, %p118
      %p121 = scmp.ne.s32.totalorder %s106, %s120
      %p122 = scmp.eq.s32.totalorder %s33, 0
      %p123 = por %p121, %p122
      %s125 = sadd.s32 %s124, 1
      %p128 = scmp.eq.s32.totalorder %s27, 1
      %p129 = scmp.ne.s32.totalorder %s124, %s126
      %p130 = scmp.eq.s32.totalorder %s27, 0
      %p131 = por %p129, %p130
      %p132 = scmp.ne.s32.totalorder %s124, %s126
      %p133 = scmp.eq.s32.totalorder %s32, 1
      %p134 = por %p132, %p133
      %p135 = scmp.ne.s32.totalorder %s126, %s127
      %p136 = scmp.eq.s32.totalorder %s32, 0
      %p137 = por %p135, %p136
      %p138 = scmp.ne.s32.totalorder %s126, %s127
      %p139 = scmp.eq.s32.totalorder %s33, 1
      %p140 = por %p138, %p139
      %p142 = scmp.ne.s32.totalorder %s127, %s141
      %p143 = scmp.eq.s32.totalorder %s33, 0
      %p144 = por %p142, %p143
      %s146 = sadd.s32 %s145, 1
      %p149 = scmp.eq.s32.totalorder %s27, 1
      %p150 = scmp.ne.s32.totalorder %s145, %s147
      %p151 = scmp.eq.s32.totalorder %s27, 0
      %p152 = por %p150, %p151
      %p153 = scmp.ne.s32.totalorder %s145, %s147
      %p154 = scmp.eq.s32.totalorder %s32, 1
      %p155 = por %p153, %p154
      %p156 = scmp.ne.s32.totalorder %s147, %s148
      %p157 = scmp.eq.s32.totalorder %s32, 0
      %p158 = por %p156, %p157
      %p159 = scmp.ne.s32.totalorder %s147, %s148
      %p160 = scmp.eq.s32.totalorder %s33, 1
      %p161 = por %p159, %p160
      %p163 = scmp.ne.s32.totalorder %s148, %s162
      %p164 = scmp.eq.s32.totalorder %s33, 0
      %p165 = por %p163, %p164
      %s167 = sadd.s32 %s166, 1
      %p170 = scmp.eq.s32.totalorder %s27, 1
      %p171 = scmp.ne.s32.totalorder %s166, %s168
      %p172 = scmp.eq.s32.totalorder %s27, 0
      %p173 = por %p171, %p172
      %p174 = scmp.ne.s32.totalorder %s166, %s168
      %p175 = scmp.eq.s32.totalorder %s32, 1
      %p176 = por %p174, %p175
      %p177 = scmp.ne.s32.totalorder %s168, %s169
      %p178 = scmp.eq.s32.totalorder %s32, 0
      %p179 = por %p177, %p178
      %p180 = scmp.ne.s32.totalorder %s168, %s169
      %p181 = scmp.eq.s32.totalorder %s33, 1
      %p182 = por %p180, %p181
      %p184 = scmp.ne.s32.totalorder %s169, %s183
      %p185 = scmp.eq.s32.totalorder %s33, 0
      %p186 = por %p184, %p185
      %s187 = ssub.s32 %s27, %s34
      %p188 = scmp.eq.s32.totalorder %s187, 0
      %s190 = sadd.s32 %s189, 1
      %s191 = scalar_select %p188, %s189, %s190
      %p194 = pneg %p188
      %p195 = scmp.eq.s32.totalorder %s27, 1
      %p196 = por %p194, %p195
      %p197 = scmp.ne.s32.totalorder %s189, %s192
      %p198 = scmp.eq.s32.totalorder %s27, 0
      %p199 = por %p197, %p198
      %p200 = scmp.ne.s32.totalorder %s189, %s192
      %p201 = scmp.eq.s32.totalorder %s32, 1
      %p202 = por %p200, %p201
      %p203 = scmp.ne.s32.totalorder %s192, %s193
      %p204 = scmp.eq.s32.totalorder %s32, 0
      %p205 = por %p203, %p204
      %p206 = scmp.ne.s32.totalorder %s192, %s193
      %p207 = scmp.eq.s32.totalorder %s33, 1
      %p208 = por %p206, %p207
      %p210 = scmp.ne.s32.totalorder %s193, %s209
      %p211 = scmp.eq.s32.totalorder %s33, 0
      %p212 = por %p210, %p211
      %s213 = ssub.s32 %s27, %s34
      %p214 = scmp.eq.s32.totalorder %s213, 0
      %s216 = sadd.s32 %s215, 1
      %s217 = scalar_select %p214, %s215, %s216
      %p220 = pneg %p214
      %p221 = scmp.eq.s32.totalorder %s27, 1
      %p222 = por %p220, %p221
      %p223 = scmp.ne.s32.totalorder %s215, %s218
      %p224 = scmp.eq.s32.totalorder %s27, 0
      %p225 = por %p223, %p224
      %p226 = scmp.ne.s32.totalorder %s215, %s218
      %p227 = scmp.eq.s32.totalorder %s32, 1
      %p228 = por %p226, %p227
      %p229 = scmp.ne.s32.totalorder %s218, %s219
      %p230 = scmp.eq.s32.totalorder %s32, 0
      %p231 = por %p229, %p230
      %p232 = scmp.ne.s32.totalorder %s218, %s219
      %p233 = scmp.eq.s32.totalorder %s33, 1
      %p234 = por %p232, %p233
      %p236 = scmp.ne.s32.totalorder %s219, %s235
      %p237 = scmp.eq.s32.totalorder %s33, 0
      %p238 = por %p236, %p237
      %s239 = ssub.s32 %s27, %s34
      %p240 = scmp.eq.s32.totalorder %s239, 0
      %s242 = sadd.s32 %s241, 1
      %s243 = scalar_select %p240, %s241, %s242
      %p246 = pneg %p240
      %p247 = scmp.eq.s32.totalorder %s27, 1
      %p248 = por %p246, %p247
      %p249 = scmp.ne.s32.totalorder %s241, %s244
      %p250 = scmp.eq.s32.totalorder %s27, 0
      %p251 = por %p249, %p250
      %p252 = scmp.ne.s32.totalorder %s241, %s244
      %p253 = scmp.eq.s32.totalorder %s32, 1
      %p254 = por %p252, %p253
      %p255 = scmp.ne.s32.totalorder %s244, %s245
      %p256 = scmp.eq.s32.totalorder %s32, 0
      %p257 = por %p255, %p256
      %p258 = scmp.ne.s32.totalorder %s244, %s245
      %p259 = scmp.eq.s32.totalorder %s33, 1
      %p260 = por %p258, %p259
      %p262 = scmp.ne.s32.totalorder %s245, %s261
      %p263 = scmp.eq.s32.totalorder %s33, 0
      %p264 = por %p262, %p263
      %p265 = scmp.le.s32.totalorder 1, %s27
      %p266 = scmp.lt.s32.totalorder %s27, 3
      %p267 = pnand %p265, %p266
      %p268 = pneg %p267
      // Predicated region
      $region9: #{tpu_custom_call.1} parent=5 // pred_check
        _
      $region10: #{tpu_custom_call.1} parent=5 // pred_check_branch
        %270 = sbr.rel (%p267) target = $region12
      $region11: #{tpu_custom_call.1} parent=5 // pred_region
        %s271 = ssub.s32 %s27, 1
        // Predicated region
        $region13: #{tpu_custom_call.1} parent=11 // pred_check
          %p272 = pneg %p74
        $region14: #{tpu_custom_call.1} parent=11 // pred_check_branch
          %274 = sbr.rel (%p272) target = $region16
        $region15: #{tpu_custom_call.1} parent=11 // pred_region
          %s276 = ssub.s32 2048, 2048
          %277 = vsyncadd [#allocation6], %s276
          %s278 = sshll.u32 [#allocation5], 4
          %s279 = int_to_ptr.vmem [resolvable:$true] %s278
          %284 = dma.hbm_to_vmem [thread:$0]  %s1, 2048, %s279, [#allocation6], 128, 128, 8
        $region16: #{tpu_custom_call.1} parent=11 // pred_fallthru
          _
        // Predicated region
        $region17: #{tpu_custom_call.1} parent=11 // pred_check
          %p285 = pneg %p95
        $region18: #{tpu_custom_call.1} parent=11 // pred_check_branch
          %287 = sbr.rel (%p285) target = $region20
        $region19: #{tpu_custom_call.1} parent=11 // pred_region
          _
        $region20: #{tpu_custom_call.1} parent=11 // pred_fallthru
          _
        // Predicated region
        $region21: #{tpu_custom_call.1} parent=11 // pred_check
          %p288 = pneg %p116
        $region22: #{tpu_custom_call.1} parent=11 // pred_check_branch
          %290 = sbr.rel (%p288) target = $region24
        $region23: #{tpu_custom_call.1} parent=11 // pred_region
          %s292 = ssub.s32 2048, 2048
          %293 = vsyncadd [#allocation6], %s292
          %s294 = sshll.u32 [#allocation7], 4
          %s295 = int_to_ptr.vmem [resolvable:$true] %s294
          %300 = dma.hbm_to_vmem [thread:$0]  %s3, 2048, %s295, [#allocation6], 128, 128, 8
        $region24: #{tpu_custom_call.1} parent=11 // pred_fallthru
          _
        // Predicated region
        $region25: #{tpu_custom_call.1} parent=11 // pred_check
          %p301 = pneg %p137
        $region26: #{tpu_custom_call.1} parent=11 // pred_check_branch
          %303 = sbr.rel (%p301) target = $region28
        $region27: #{tpu_custom_call.1} parent=11 // pred_region
          _
        $region28: #{tpu_custom_call.1} parent=11 // pred_fallthru
          _
        // Predicated region
        $region29: #{tpu_custom_call.1} parent=11 // pred_check
          %p304 = pneg %p158
        $region30: #{tpu_custom_call.1} parent=11 // pred_check_branch
          %306 = sbr.rel (%p304) target = $region32
        $region31: #{tpu_custom_call.1} parent=11 // pred_region
          %s308 = ssub.s32 2048, 2048
          %309 = vsyncadd [#allocation9], %s308
          %s310 = sshll.u32 [#allocation8], 4
          %s311 = int_to_ptr.vmem [resolvable:$true] %s310
          %316 = dma.hbm_to_vmem [thread:$0]  %s5, 2048, %s311, [#allocation9], 128, 128, 8
        $region32: #{tpu_custom_call.1} parent=11 // pred_fallthru
          _
        // Predicated region
        $region33: #{tpu_custom_call.1} parent=11 // pred_check
          %p317 = pneg %p179
        $region34: #{tpu_custom_call.1} parent=11 // pred_check_branch
          %319 = sbr.rel (%p317) target = $region36
        $region35: #{tpu_custom_call.1} parent=11 // pred_region
          _
        $region36: #{tpu_custom_call.1} parent=11 // pred_fallthru
          _
      $region12: #{tpu_custom_call.1} parent=5 // pred_fallthru
        _
      %p320 = scmp.lt.s32.totalorder %s27, 2
      // Predicated region
      $region37: #{tpu_custom_call.1} parent=5 // pred_check
        %p321 = pneg %p320
      $region38: #{tpu_custom_call.1} parent=5 // pred_check_branch
        %323 = sbr.rel (%p321) target = $region40
      $region39: #{tpu_custom_call.1} parent=5 // pred_region
        // Predicated region
        $region41: #{tpu_custom_call.1} parent=39 // pred_check
          %p324 = pneg %p47
        $region42: #{tpu_custom_call.1} parent=39 // pred_check_branch
          %326 = sbr.rel (%p324) target = $region44
        $region43: #{tpu_custom_call.1} parent=39 // pred_region
          %s327 = sand.u32 %s37, 1
          %s328 = scalar_lea.sflag [#allocation3], %s327
          %s329 = sand.u32 %s37, 1
          %s330 = smul.addr %s329, 8
          %s331 = scalar_lea.vmem [#allocation2], %s330
          %s333 = ssub.s32 128, 128
          %334 = vsyncadd %s328, %s333
          %s335 = smul.addr %s27, 128
          %s336 = scalar_lea.hbm %s0, %s335
          %s338 = sshll.u32 %s331, 4
          %s339 = int_to_ptr.vmem [resolvable:$true] %s338
          %341 = dma.hbm_to_vmem [thread:$0]  %s336, 128, %s339, %s328
        $region44: #{tpu_custom_call.1} parent=39 // pred_fallthru
          _
      $region40: #{tpu_custom_call.1} parent=5 // pred_fallthru
        _
      %p342 = scmp.le.s32.totalorder 1, %s27
      %p343 = scmp.lt.s32.totalorder %s27, 3
      %p344 = pnand %p342, %p343
      %p345 = pneg %p344
      // Predicated region
      $region45: #{tpu_custom_call.1} parent=5 // pred_check
        _
      $region46: #{tpu_custom_call.1} parent=5 // pred_check_branch
        %347 = sbr.rel (%p344) target = $region48
      $region47: #{tpu_custom_call.1} parent=5 // pred_region
        %s348 = ssub.s32 %s27, 1
        %s349 = sand.u32 %s40, 1
        %s350 = scalar_lea.sflag [#allocation3], %s349
        %s351 = sand.u32 %s40, 1
        %s352 = smul.addr %s351, 8
        %s353 = scalar_lea.vmem [#allocation2], %s352
        // Predicated region
        $region49: #{tpu_custom_call.1} parent=47 // pred_check
          %p354 = pneg %p53
        $region50: #{tpu_custom_call.1} parent=47 // pred_check_branch
          %356 = sbr.rel (%p354) target = $region52
        $region51: #{tpu_custom_call.1} parent=47 // pred_region
          %357 = dma.done %s350, 128
        $region52: #{tpu_custom_call.1} parent=47 // pred_fallthru
          _
        // Predicated region
        $region53: #{tpu_custom_call.1} parent=47 // pred_check
          %p358 = pneg %p74
        $region54: #{tpu_custom_call.1} parent=47 // pred_check_branch
          %360 = sbr.rel (%p358) target = $region56
        $region55: #{tpu_custom_call.1} parent=47 // pred_region
          %361 = dma.done [#allocation6], 2048
        $region56: #{tpu_custom_call.1} parent=47 // pred_fallthru
          _
        // Predicated region
        $region57: #{tpu_custom_call.1} parent=47 // pred_check
          %p362 = pneg %p116
        $region58: #{tpu_custom_call.1} parent=47 // pred_check_branch
          %364 = sbr.rel (%p362) target = $region60
        $region59: #{tpu_custom_call.1} parent=47 // pred_region
          %365 = dma.done [#allocation6], 2048
        $region60: #{tpu_custom_call.1} parent=47 // pred_fallthru
          _
        // Predicated region
        $region61: #{tpu_custom_call.1} parent=47 // pred_check
          %p366 = pneg %p158
        $region62: #{tpu_custom_call.1} parent=47 // pred_check_branch
          %368 = sbr.rel (%p366) target = $region64
        $region63: #{tpu_custom_call.1} parent=47 // pred_region
          %369 = dma.done [#allocation9], 2048
        $region64: #{tpu_custom_call.1} parent=47 // pred_fallthru
          _
        %s370 = sand.u32 %s40, 1
        %s371 = scalar_lea.sflag [#allocation3], %s370
        %s372 = sand.u32 %s40, 1
        %s373 = smul.addr %s372, 8
        %s374 = scalar_lea.vmem [#allocation2], %s373
        %p375 = pneg %p53
        %p376 = pneg %p50
        %p377 = pneg %p74
        %p378 = pneg %p71
        %p379 = pneg %p95
        %p380 = pneg %p92
        %p381 = pneg %p116
        %p382 = pneg %p113
        %p383 = pneg %p137
        %p384 = pneg %p134
        %p385 = pneg %p158
        %p386 = pneg %p155
        %p387 = pneg %p179
        %p388 = pneg %p176
        %p389 = pneg %p205
        %p390 = pneg %p202
        %s391 = sand.u32 %s192, 1
        %s392 = scalar_lea.sflag [#allocation4], %s391
        %s393 = sand.u32 %s192, 1
        %s394 = smul.addr %s393, 8
        %s395 = scalar_lea.vmem [#allocation10], %s394
        %p396 = pneg %p231
        %p397 = pneg %p228
        %s398 = sand.u32 %s32, 1
        %s399 = scalar_lea.sflag [#allocation12], %s398
        %s400 = sand.u32 %s218, 1
        %s401 = smul.addr %s400, 8
        %s402 = scalar_lea.vmem [#allocation11], %s401
        %p403 = pneg %p257
        %p404 = pneg %p254
        %s405 = sand.u32 %s32, 1
        %s406 = scalar_lea.sflag [#allocation12], %s405
        %s407 = sand.u32 %s244, 1
        %s408 = smul.addr %s407, 8
        %s409 = scalar_lea.vmem [#allocation13], %s408
        %v411 = vld [vmem:[%s353] sm:$0xff]
        %v412 = vpack.c.bf16 %v411, %v411
        %v413 = vld [vmem:[#allocation5] sm:$0xff]
        %v414 = vld [vmem:[#allocation5 + $0x8] sm:$0xff]
        %v415 = vld [vmem:[#allocation5 + $0x10] sm:$0xff]
        %v416 = vld [vmem:[#allocation5 + $0x18] sm:$0xff]
        %v417 = vld [vmem:[#allocation5 + $0x20] sm:$0xff]
        %v418 = vld [vmem:[#allocation5 + $0x28] sm:$0xff]
        %v419 = vld [vmem:[#allocation5 + $0x30] sm:$0xff]
        %v420 = vld [vmem:[#allocation5 + $0x38] sm:$0xff]
        %v421 = vld [vmem:[#allocation5 + $0x40] sm:$0xff]
        %v422 = vld [vmem:[#allocation5 + $0x48] sm:$0xff]
        %v423 = vld [vmem:[#allocation5 + $0x50] sm:$0xff]
        %v424 = vld [vmem:[#allocation5 + $0x58] sm:$0xff]
        %v425 = vld [vmem:[#allocation5 + $0x60] sm:$0xff]
        %v426 = vld [vmem:[#allocation5 + $0x68] sm:$0xff]
        %v427 = vld [vmem:[#allocation5 + $0x70] sm:$0xff]
        %v428 = vld [vmem:[#allocation5 + $0x78] sm:$0xff]
        %v429 = vld [vmem:[%s2] sm:$0x3]
        %v431 = vlaneseq
        %v432 = vshrl.u32 %v431, 7
        %v433 = vsub.s32 0, %v432
        %v434 = vrot.slane %v429, %v433
        %v435 = vlaneseq
        %v436 = vshrl.u32 %v435, 7
        %v437 = vsub.s32 1, %v436
        %v438 = vrot.slane %v429, %v437
        %v457 = vunpack.c.l.b16 %v413
        %v458 = vunpack.c.h.b16 %v413
        %v459 = vunpack.c.l.b16 %v414
        %v460 = vunpack.c.h.b16 %v414
        %v461 = vunpack.c.l.b16 %v415
        %v462 = vunpack.c.h.b16 %v415
        %v463 = vunpack.c.l.b16 %v416
        %v464 = vunpack.c.h.b16 %v416
        %v465 = vunpack.c.l.b16 %v417
        %v466 = vunpack.c.h.b16 %v417
        %v467 = vunpack.c.l.b16 %v418
        %v468 = vunpack.c.h.b16 %v418
        %v469 = vunpack.c.l.b16 %v419
        %v470 = vunpack.c.h.b16 %v419
        %v471 = vunpack.c.l.b16 %v420
        %v472 = vunpack.c.h.b16 %v420
        %v473 = vunpack.c.l.b16 %v421
        %v474 = vunpack.c.h.b16 %v421
        %v475 = vunpack.c.l.b16 %v422
        %v476 = vunpack.c.h.b16 %v422
        %v477 = vunpack.c.l.b16 %v423
        %v478 = vunpack.c.h.b16 %v423
        %v479 = vunpack.c.l.b16 %v424
        %v480 = vunpack.c.h.b16 %v424
        %v481 = vunpack.c.l.b16 %v425
        %v482 = vunpack.c.h.b16 %v425
        %v483 = vunpack.c.l.b16 %v426
        %v484 = vunpack.c.h.b16 %v426
        %v485 = vunpack.c.l.b16 %v427
        %v486 = vunpack.c.h.b16 %v427
        %v487 = vunpack.c.l.b16 %v428
        %v488 = vunpack.c.h.b16 %v428
        %v489 = vpack.c.b16 %v459, %v457
        %v490 = vpack.c.b16 %v460, %v458
        %v491 = vpack.c.b16 %v463, %v461
        %v492 = vpack.c.b16 %v464, %v462
        %v493 = vpack.c.b16 %v467, %v465
        %v494 = vpack.c.b16 %v468, %v466
        %v495 = vpack.c.b16 %v471, %v469
        %v496 = vpack.c.b16 %v472, %v470
        %v497 = vpack.c.b16 %v475, %v473
        %v498 = vpack.c.b16 %v476, %v474
        %v499 = vpack.c.b16 %v479, %v477
        %v500 = vpack.c.b16 %v480, %v478
        %v501 = vpack.c.b16 %v483, %v481
        %v502 = vpack.c.b16 %v484, %v482
        %v503 = vpack.c.b16 %v487, %v485
        %v504 = vpack.c.b16 %v488, %v486
        %521 = vmatprep.subr.bf16.mxu0 %v490
        %522 = vmatpush1.bf16.msra.mxu0 %v489
        %523 = vmatprep.subr.bf16.mxu0 %v492
        %524 = vmatpush1.bf16.msra.mxu0 %v491
        %525 = vmatprep.subr.bf16.mxu0 %v494
        %526 = vmatpush1.bf16.msra.mxu0 %v493
        %527 = vmatprep.subr.bf16.mxu0 %v496
        %528 = vmatpush1.bf16.msra.mxu0 %v495
        %529 = vmatprep.subr.bf16.mxu0 %v498
        %530 = vmatpush1.bf16.msra.mxu0 %v497
        %531 = vmatprep.subr.bf16.mxu0 %v500
        %532 = vmatpush1.bf16.msra.mxu0 %v499
        %533 = vmatprep.subr.bf16.mxu0 %v502
        %534 = vmatpush1.bf16.msra.mxu0 %v501
        %535 = vmatprep.subr.bf16.mxu0 %v504
        %536 = vmatpush1.bf16.msra.mxu0 %v503
        %537 = vmatprep.subr.bf16.mxu0 0
        %538 = vmatpush1.bf16.msra.mxu0 0
        %539 = vmatprep.subr.bf16.mxu0 0
        %540 = vmatpush1.bf16.msra.mxu0 0
        %541 = vmatprep.subr.bf16.mxu0 0
        %542 = vmatpush1.bf16.msra.mxu0 0
        %543 = vmatprep.subr.bf16.mxu0 0
        %544 = vmatpush1.bf16.msra.mxu0 0
        %545 = vmatprep.subr.bf16.mxu0 0
        %546 = vmatpush1.bf16.msra.mxu0 0
        %547 = vmatprep.subr.bf16.mxu0 0
        %548 = vmatpush1.bf16.msra.mxu0 0
        %549 = vmatprep.subr.bf16.mxu0 0
        %550 = vmatpush1.bf16.msra.mxu0 0
        %551 = vmatprep.subr.bf16.mxu0 0
        %552 = vmatpush1.bf16.msra.mxu0 0
        %553 = vmatprep.mubr.bf16.mxu0 0
        %554 = vmatmul.mubr.bf16.gmra.mrb[0].mxu0 %v412
        %v555 = vpop.f32.mrb[0].mxu0
        %v556 = vadd.f32 %v434, %v555
        %v557 = vpop.f32.mrb[0].mxu0
        %v558 = vadd.f32 %v438, %v557
        %v559 = vpop.f32.mrb[0].mxu0
        %v560 = vpop.f32.mrb[0].mxu0
        %561 = vdwg.mxu0
        %v562 = vxor.u32 %v558, 2147483648
        %v563 = vmul.f32 %v562, 1.442695
        %v564 = vpow.pop %v563
        %v565 = vadd.f32 %v564, 1.0
        %v566 = vrcp.pop %v565
        %v567 = vmul.f32 1.0, %v566
        %v568 = vmul.f32 %v556, %v567
        %v569 = vpack.c.bf16 %v568, %v568
        %v570 = vld [vmem:[#allocation7] sm:$0xff]
        %v571 = vld [vmem:[#allocation7 + $0x8] sm:$0xff]
        %v572 = vld [vmem:[#allocation7 + $0x10] sm:$0xff]
        %v573 = vld [vmem:[#allocation7 + $0x18] sm:$0xff]
        %v574 = vld [vmem:[#allocation7 + $0x20] sm:$0xff]
        %v575 = vld [vmem:[#allocation7 + $0x28] sm:$0xff]
        %v576 = vld [vmem:[#allocation7 + $0x30] sm:$0xff]
        %v577 = vld [vmem:[#allocation7 + $0x38] sm:$0xff]
        %v578 = vld [vmem:[#allocation7 + $0x40] sm:$0xff]
        %v579 = vld [vmem:[#allocation7 + $0x48] sm:$0xff]
        %v580 = vld [vmem:[#allocation7 + $0x50] sm:$0xff]
        %v581 = vld [vmem:[#allocation7 + $0x58] sm:$0xff]
        %v582 = vld [vmem:[#allocation7 + $0x60] sm:$0xff]
        %v583 = vld [vmem:[#allocation7 + $0x68] sm:$0xff]
        %v584 = vld [vmem:[#allocation7 + $0x70] sm:$0xff]
        %v585 = vld [vmem:[#allocation7 + $0x78] sm:$0xff]
        %v586 = vld [vmem:[%s4] sm:$0x3]
        %v588 = vlaneseq
        %v589 = vshrl.u32 %v588, 7
        %v590 = vsub.s32 0, %v589
        %v591 = vrot.slane %v586, %v590
        %v592 = vlaneseq
        %v593 = vshrl.u32 %v592, 7
        %v594 = vsub.s32 1, %v593
        %v595 = vrot.slane %v586, %v594
        %v614 = vunpack.c.l.b16 %v570
        %v615 = vunpack.c.h.b16 %v570
        %v616 = vunpack.c.l.b16 %v571
        %v617 = vunpack.c.h.b16 %v571
        %v618 = vunpack.c.l.b16 %v572
        %v619 = vunpack.c.h.b16 %v572
        %v620 = vunpack.c.l.b16 %v573
        %v621 = vunpack.c.h.b16 %v573
        %v622 = vunpack.c.l.b16 %v574
        %v623 = vunpack.c.h.b16 %v574
        %v624 = vunpack.c.l.b16 %v575
        %v625 = vunpack.c.h.b16 %v575
        %v626 = vunpack.c.l.b16 %v576
        %v627 = vunpack.c.h.b16 %v576
        %v628 = vunpack.c.l.b16 %v577
        %v629 = vunpack.c.h.b16 %v577
        %v630 = vunpack.c.l.b16 %v578
        %v631 = vunpack.c.h.b16 %v578
        %v632 = vunpack.c.l.b16 %v579
        %v633 = vunpack.c.h.b16 %v579
        %v634 = vunpack.c.l.b16 %v580
        %v635 = vunpack.c.h.b16 %v580
        %v636 = vunpack.c.l.b16 %v581
        %v637 = vunpack.c.h.b16 %v581
        %v638 = vunpack.c.l.b16 %v582
        %v639 = vunpack.c.h.b16 %v582
        %v640 = vunpack.c.l.b16 %v583
        %v641 = vunpack.c.h.b16 %v583
        %v642 = vunpack.c.l.b16 %v584
        %v643 = vunpack.c.h.b16 %v584
        %v644 = vunpack.c.l.b16 %v585
        %v645 = vunpack.c.h.b16 %v585
        %v646 = vpack.c.b16 %v616, %v614
        %v647 = vpack.c.b16 %v617, %v615
        %v648 = vpack.c.b16 %v620, %v618
        %v649 = vpack.c.b16 %v621, %v619
        %v650 = vpack.c.b16 %v624, %v622
        %v651 = vpack.c.b16 %v625, %v623
        %v652 = vpack.c.b16 %v628, %v626
        %v653 = vpack.c.b16 %v629, %v627
        %v654 = vpack.c.b16 %v632, %v630
        %v655 = vpack.c.b16 %v633, %v631
        %v656 = vpack.c.b16 %v636, %v634
        %v657 = vpack.c.b16 %v637, %v635
        %v658 = vpack.c.b16 %v640, %v638
        %v659 = vpack.c.b16 %v641, %v639
        %v660 = vpack.c.b16 %v644, %v642
        %v661 = vpack.c.b16 %v645, %v643
        %678 = vmatprep.subr.bf16.mxu0 %v647
        %679 = vmatpush1.bf16.msra.mxu0 %v646
        %680 = vmatprep.subr.bf16.mxu0 %v649
        %681 = vmatpush1.bf16.msra.mxu0 %v648
        %682 = vmatprep.subr.bf16.mxu0 %v651
        %683 = vmatpush1.bf16.msra.mxu0 %v650
        %684 = vmatprep.subr.bf16.mxu0 %v653
        %685 = vmatpush1.bf16.msra.mxu0 %v652
        %686 = vmatprep.subr.bf16.mxu0 %v655
        %687 = vmatpush1.bf16.msra.mxu0 %v654
        %688 = vmatprep.subr.bf16.mxu0 %v657
        %689 = vmatpush1.bf16.msra.mxu0 %v656
        %690 = vmatprep.subr.bf16.mxu0 %v659
        %691 = vmatpush1.bf16.msra.mxu0 %v658
        %692 = vmatprep.subr.bf16.mxu0 %v661
        %693 = vmatpush1.bf16.msra.mxu0 %v660
        %694 = vmatprep.subr.bf16.mxu0 0
        %695 = vmatpush1.bf16.msra.mxu0 0
        %696 = vmatprep.subr.bf16.mxu0 0
        %697 = vmatpush1.bf16.msra.mxu0 0
        %698 = vmatprep.subr.bf16.mxu0 0
        %699 = vmatpush1.bf16.msra.mxu0 0
        %700 = vmatprep.subr.bf16.mxu0 0
        %701 = vmatpush1.bf16.msra.mxu0 0
        %702 = vmatprep.subr.bf16.mxu0 0
        %703 = vmatpush1.bf16.msra.mxu0 0
        %704 = vmatprep.subr.bf16.mxu0 0
        %705 = vmatpush1.bf16.msra.mxu0 0
        %706 = vmatprep.subr.bf16.mxu0 0
        %707 = vmatpush1.bf16.msra.mxu0 0
        %708 = vmatprep.subr.bf16.mxu0 0
        %709 = vmatpush1.bf16.msra.mxu0 0
        %710 = vmatprep.mubr.bf16.mxu0 0
        %711 = vmatmul.mubr.bf16.gmra.mrb[0].mxu0 %v569
        %v712 = vpop.f32.mrb[0].mxu0
        %v713 = vadd.f32 %v591, %v712
        %v714 = vpop.f32.mrb[0].mxu0
        %v715 = vadd.f32 %v595, %v714
        %v716 = vpop.f32.mrb[0].mxu0
        %v717 = vpop.f32.mrb[0].mxu0
        %718 = vdwg.mxu0
        %v719 = vxor.u32 %v715, 2147483648
        %v720 = vmul.f32 %v719, 1.442695
        %v721 = vpow.pop %v720
        %v722 = vadd.f32 %v721, 1.0
        %v723 = vrcp.pop %v722
        %v724 = vmul.f32 1.0, %v723
        %v725 = vmul.f32 %v713, %v724
        %v726 = vpack.c.bf16 %v725, %v725
        %v727 = vld [vmem:[#allocation8] sm:$0xff]
        %v728 = vld [vmem:[#allocation8 + $0x8] sm:$0xff]
        %v729 = vld [vmem:[#allocation8 + $0x10] sm:$0xff]
        %v730 = vld [vmem:[#allocation8 + $0x18] sm:$0xff]
        %v731 = vld [vmem:[#allocation8 + $0x20] sm:$0xff]
        %v732 = vld [vmem:[#allocation8 + $0x28] sm:$0xff]
        %v733 = vld [vmem:[#allocation8 + $0x30] sm:$0xff]
        %v734 = vld [vmem:[#allocation8 + $0x38] sm:$0xff]
        %v735 = vld [vmem:[#allocation8 + $0x40] sm:$0xff]
        %v736 = vld [vmem:[#allocation8 + $0x48] sm:$0xff]
        %v737 = vld [vmem:[#allocation8 + $0x50] sm:$0xff]
        %v738 = vld [vmem:[#allocation8 + $0x58] sm:$0xff]
        %v739 = vld [vmem:[#allocation8 + $0x60] sm:$0xff]
        %v740 = vld [vmem:[#allocation8 + $0x68] sm:$0xff]
        %v741 = vld [vmem:[#allocation8 + $0x70] sm:$0xff]
        %v742 = vld [vmem:[#allocation8 + $0x78] sm:$0xff]
        %v743 = vld [vmem:[%s6] sm:$0x3]
        %v745 = vlaneseq
        %v746 = vshrl.u32 %v745, 7
        %v747 = vsub.s32 0, %v746
        %v748 = vrot.slane %v743, %v747
        %v749 = vlaneseq
        %v750 = vshrl.u32 %v749, 7
        %v751 = vsub.s32 1, %v750
        %v752 = vrot.slane %v743, %v751
        %v771 = vunpack.c.l.b16 %v727
        %v772 = vunpack.c.h.b16 %v727
        %v773 = vunpack.c.l.b16 %v728
        %v774 = vunpack.c.h.b16 %v728
        %v775 = vunpack.c.l.b16 %v729
        %v776 = vunpack.c.h.b16 %v729
        %v777 = vunpack.c.l.b16 %v730
        %v778 = vunpack.c.h.b16 %v730
        %v779 = vunpack.c.l.b16 %v731
        %v780 = vunpack.c.h.b16 %v731
        %v781 = vunpack.c.l.b16 %v732
        %v782 = vunpack.c.h.b16 %v732
        %v783 = vunpack.c.l.b16 %v733
        %v784 = vunpack.c.h.b16 %v733
        %v785 = vunpack.c.l.b16 %v734
        %v786 = vunpack.c.h.b16 %v734
        %v787 = vunpack.c.l.b16 %v735
        %v788 = vunpack.c.h.b16 %v735
        %v789 = vunpack.c.l.b16 %v736
        %v790 = vunpack.c.h.b16 %v736
        %v791 = vunpack.c.l.b16 %v737
        %v792 = vunpack.c.h.b16 %v737
        %v793 = vunpack.c.l.b16 %v738
        %v794 = vunpack.c.h.b16 %v738
        %v795 = vunpack.c.l.b16 %v739
        %v796 = vunpack.c.h.b16 %v739
        %v797 = vunpack.c.l.b16 %v740
        %v798 = vunpack.c.h.b16 %v740
        %v799 = vunpack.c.l.b16 %v741
        %v800 = vunpack.c.h.b16 %v741
        %v801 = vunpack.c.l.b16 %v742
        %v802 = vunpack.c.h.b16 %v742
        %v803 = vpack.c.b16 %v773, %v771
        %v804 = vpack.c.b16 %v774, %v772
        %v805 = vpack.c.b16 %v777, %v775
        %v806 = vpack.c.b16 %v778, %v776
        %v807 = vpack.c.b16 %v781, %v779
        %v808 = vpack.c.b16 %v782, %v780
        %v809 = vpack.c.b16 %v785, %v783
        %v810 = vpack.c.b16 %v786, %v784
        %v811 = vpack.c.b16 %v789, %v787
        %v812 = vpack.c.b16 %v790, %v788
        %v813 = vpack.c.b16 %v793, %v791
        %v814 = vpack.c.b16 %v794, %v792
        %v815 = vpack.c.b16 %v797, %v795
        %v816 = vpack.c.b16 %v798, %v796
        %v817 = vpack.c.b16 %v801, %v799
        %v818 = vpack.c.b16 %v802, %v800
        %835 = vmatprep.subr.bf16.mxu0 %v804
        %836 = vmatpush1.bf16.msra.mxu0 %v803
        %837 = vmatprep.subr.bf16.mxu0 %v806
        %838 = vmatpush1.bf16.msra.mxu0 %v805
        %839 = vmatprep.subr.bf16.mxu0 %v808
        %840 = vmatpush1.bf16.msra.mxu0 %v807
        %841 = vmatprep.subr.bf16.mxu0 %v810
        %842 = vmatpush1.bf16.msra.mxu0 %v809
        %843 = vmatprep.subr.bf16.mxu0 %v812
        %844 = vmatpush1.bf16.msra.mxu0 %v811
        %845 = vmatprep.subr.bf16.mxu0 %v814
        %846 = vmatpush1.bf16.msra.mxu0 %v813
        %847 = vmatprep.subr.bf16.mxu0 %v816
        %848 = vmatpush1.bf16.msra.mxu0 %v815
        %849 = vmatprep.subr.bf16.mxu0 %v818
        %850 = vmatpush1.bf16.msra.mxu0 %v817
        %851 = vmatprep.subr.bf16.mxu0 0
        %852 = vmatpush1.bf16.msra.mxu0 0
        %853 = vmatprep.subr.bf16.mxu0 0
        %854 = vmatpush1.bf16.msra.mxu0 0
        %855 = vmatprep.subr.bf16.mxu0 0
        %856 = vmatpush1.bf16.msra.mxu0 0
        %857 = vmatprep.subr.bf16.mxu0 0
        %858 = vmatpush1.bf16.msra.mxu0 0
        %859 = vmatprep.subr.bf16.mxu0 0
        %860 = vmatpush1.bf16.msra.mxu0 0
        %861 = vmatprep.subr.bf16.mxu0 0
        %862 = vmatpush1.bf16.msra.mxu0 0
        %863 = vmatprep.subr.bf16.mxu0 0
        %864 = vmatpush1.bf16.msra.mxu0 0
        %865 = vmatprep.subr.bf16.mxu0 0
        %866 = vmatpush1.bf16.msra.mxu0 0
        %867 = vmatprep.mubr.bf16.mxu0 0
        %868 = vmatmul.mubr.bf16.gmra.mrb[0].mxu0 %v726
        %v869 = vpop.f32.mrb[0].mxu0
        %v870 = vadd.f32 %v748, %v869
        %v871 = vpop.f32.mrb[0].mxu0
        %v872 = vadd.f32 %v752, %v871
        %v873 = vpop.f32.mrb[0].mxu0
        %v874 = vpop.f32.mrb[0].mxu0
        %875 = vdwg.mxu0
        %876 = vst [vmem:[%s395] sm:$0xff] %v870
        %v877 = vmax.f32 %v872, -6.0
        %v878 = vmin.f32 %v877, 2.0
        %879 = vst [vmem:[%s402] sm:$0xff] %v878
        %880 = vst [vmem:[%s409] sm:$0xff] %v725
        %s881 = sand.u32 %s192, 1
        %s882 = scalar_lea.sflag [#allocation4], %s881
        %s883 = sand.u32 %s192, 1
        %s884 = smul.addr %s883, 8
        %s885 = scalar_lea.vmem [#allocation10], %s884
        %s886 = sand.u32 %s32, 1
        %s887 = scalar_lea.sflag [#allocation12], %s886
        %s888 = sand.u32 %s218, 1
        %s889 = smul.addr %s888, 8
        %s890 = scalar_lea.vmem [#allocation11], %s889
        %s891 = sand.u32 %s32, 1
        %s892 = scalar_lea.sflag [#allocation12], %s891
        %s893 = sand.u32 %s244, 1
        %s894 = smul.addr %s893, 8
        %s895 = scalar_lea.vmem [#allocation13], %s894
        // Predicated region
        $region65: #{tpu_custom_call.1} parent=47 // pred_check
          %p896 = pneg %p202
        $region66: #{tpu_custom_call.1} parent=47 // pred_check_branch
          %898 = sbr.rel (%p896) target = $region68
        $region67: #{tpu_custom_call.1} parent=47 // pred_region
          %s900 = ssub.s32 128, 128
          %901 = vsyncadd %s882, %s900
          %s902 = smul.addr %s32, 128
          %s903 = scalar_lea.hbm %s7, %s902
          %s905 = sshll.u32 %s885, 4
          %s906 = int_to_ptr.vmem [resolvable:$true] %s905
          %908 = dma.vmem_to_hbm [thread:$0]  %s906, 128, %s903, %s882
        $region68: #{tpu_custom_call.1} parent=47 // pred_fallthru
          _
        // Predicated region
        $region69: #{tpu_custom_call.1} parent=47 // pred_check
          %p909 = pneg %p228
        $region70: #{tpu_custom_call.1} parent=47 // pred_check_branch
          %911 = sbr.rel (%p909) target = $region72
        $region71: #{tpu_custom_call.1} parent=47 // pred_region
          %s913 = ssub.s32 128, 128
          %914 = vsyncadd %s887, %s913
          %s915 = smul.addr %s32, 128
          %s916 = scalar_lea.hbm %s8, %s915
          %s918 = sshll.u32 %s890, 4
          %s919 = int_to_ptr.vmem [resolvable:$true] %s918
          %921 = dma.vmem_to_hbm [thread:$0]  %s919, 128, %s916, %s887
        $region72: #{tpu_custom_call.1} parent=47 // pred_fallthru
          _
        // Predicated region
        $region73: #{tpu_custom_call.1} parent=47 // pred_check
          %p922 = pneg %p254
        $region74: #{tpu_custom_call.1} parent=47 // pred_check_branch
          %924 = sbr.rel (%p922) target = $region76
        $region75: #{tpu_custom_call.1} parent=47 // pred_region
          %s926 = ssub.s32 128, 128
          %927 = vsyncadd %s892, %s926
          %s928 = smul.addr %s32, 128
          %s929 = scalar_lea.hbm %s9, %s928
          %s931 = sshll.u32 %s895, 4
          %s932 = int_to_ptr.vmem [resolvable:$true] %s931
          %934 = dma.vmem_to_hbm [thread:$0]  %s932, 128, %s929, %s892
        $region76: #{tpu_custom_call.1} parent=47 // pred_fallthru
          _
      $region48: #{tpu_custom_call.1} parent=5 // pred_fallthru
        _
      %p935 = scmp.le.s32.totalorder 2, %s27
      // Predicated region
      $region77: #{tpu_custom_call.1} parent=5 // pred_check
        %p936 = pneg %p935
      $region78: #{tpu_custom_call.1} parent=5 // pred_check_branch
        %938 = sbr.rel (%p936) target = $region80
      $region79: #{tpu_custom_call.1} parent=5 // pred_region
        %s939 = ssub.s32 %s27, 2
        // Predicated region
        $region81: #{tpu_custom_call.1} parent=79 // pred_check
          %p940 = pneg %p208
        $region82: #{tpu_custom_call.1} parent=79 // pred_check_branch
          %942 = sbr.rel (%p940) target = $region84
        $region83: #{tpu_custom_call.1} parent=79 // pred_region
          %s943 = sand.u32 %s193, 1
          %s944 = scalar_lea.sflag [#allocation4], %s943
          %s945 = sand.u32 %s193, 1
          %s946 = smul.addr %s945, 8
          %s947 = scalar_lea.vmem [#allocation10], %s946
          %948 = dma.done %s944, 128
        $region84: #{tpu_custom_call.1} parent=79 // pred_fallthru
          _
        // Predicated region
        $region85: #{tpu_custom_call.1} parent=79 // pred_check
          %p949 = pneg %p234
        $region86: #{tpu_custom_call.1} parent=79 // pred_check_branch
          %951 = sbr.rel (%p949) target = $region88
        $region87: #{tpu_custom_call.1} parent=79 // pred_region
          %s952 = sand.u32 %s33, 1
          %s953 = scalar_lea.sflag [#allocation12], %s952
          %s954 = sand.u32 %s219, 1
          %s955 = smul.addr %s954, 8
          %s956 = scalar_lea.vmem [#allocation11], %s955
          %957 = dma.done %s953, 128
        $region88: #{tpu_custom_call.1} parent=79 // pred_fallthru
          _
        // Predicated region
        $region89: #{tpu_custom_call.1} parent=79 // pred_check
          %p958 = pneg %p260
        $region90: #{tpu_custom_call.1} parent=79 // pred_check_branch
          %960 = sbr.rel (%p958) target = $region92
        $region91: #{tpu_custom_call.1} parent=79 // pred_region
          %s961 = sand.u32 %s33, 1
          %s962 = scalar_lea.sflag [#allocation12], %s961
          %s963 = sand.u32 %s245, 1
          %s964 = smul.addr %s963, 8
          %s965 = scalar_lea.vmem [#allocation13], %s964
          %966 = dma.done %s962, 128
        $region92: #{tpu_custom_call.1} parent=79 // pred_fallthru
          _
      $region80: #{tpu_custom_call.1} parent=5 // pred_fallthru
        _
    $region6: #{tpu_custom_call.1} parent=1 // loop_footer
      %s31 = sadd.s32 1, %s27
    $region7: #{tpu_custom_call.1} parent=1 // loop_footer_branch
      %26 = sbr.rel target = $region3
    $region8: #{tpu_custom_call.1} parent=1 // loop_exit
      _
    %967 = vsyncpa [#allocation3], 1
    %s968 = scalar_lea.sflag [#allocation3], 1
    %969 = vsyncpa %s968, 1
    %970 = vsyncpa [#allocation6], 1
    %971 = vsyncpa [#allocation9], 1
    %972 = vsyncpa [#allocation4], 1
    %s973 = scalar_lea.sflag [#allocation4], 1
    %974 = vsyncpa %s973, 1
    %975 = vsyncpa [#allocation12], 1
    %s976 = scalar_lea.sflag [#allocation12], 1
    %977 = vsyncpa %s976, 1

</llo_original>
